<compile_context>
chip_gen: v6e
topology: v6e:2x2x1
jax: 0.10.0
libtpu: 0.0.40
codegen_flags: <defaults>
</compile_context>

<pallas_src>
import functools

import numpy as np
import jax
import jax.numpy as jnp
from jax import lax
from jax.experimental import pallas as pl
from jax.experimental.pallas import tpu as pltpu


def _round_up(x, m):
    return (x + m - 1) // m * m


# ------------------------------- fused kernel ---------------------------------

def _dis_block_kernel(x_ref, mask_ref, w1_ref, b1_ref, w2_ref, b2_ref,
                      wsc_ref, bsc_ref, out_ref, *, H, W, downsample, learnable_sc):
    """Fused DisBlock forward for one batch element, channels-first flat layout.

    x_ref:    (1, CinP, H*W)     mask_ref: (2, 1, H*W)
    w1_ref:   (ChidP, 9*CinP)    b1_ref:   (ChidP, 1)
    w2_ref:   (Cout, 9*ChidP)    b2_ref:   (Cout, 1)
    wsc_ref:  (Cout, CinP)       bsc_ref:  (Cout, 1)
    out_ref:  (1, Cout, H*W)  -- full resolution; when downsample=True, lane p holds the
                                 2x2 average anchored at p (wrapper keeps even (y, x)).
    """
    hw = H * W
    x = x_ref[0]                       # (CinP, HW)
    mask_l = mask_ref[0]               # (1, HW): valid when reading x-1
    mask_r = mask_ref[1]               # (1, HW): valid when reading x+1

    def shift(v, d):
        # u[:, p] = v[:, p + d]; zero where p + d falls outside [0, hw)
        if d == 0:
            return v
        c = v.shape[0]
        z = jnp.zeros((c, abs(d)), v.dtype)
        if d > 0:
            return jnp.concatenate([v[:, d:], z], axis=1)
        return jnp.concatenate([z, v[:, :hw + d]], axis=1)

    def patches_3x3(v):
        # (C, HW) -> (9*C, HW): 9 shifted + x-masked taps concatenated along K so the
        # whole 3x3 conv becomes a single MXU matmul (no 9-term accumulation loop).
        taps = []
        for ky in range(3):
            for kx in range(3):
                t = shift(v, (ky - 1) * W + (kx - 1))
                if kx == 0:
                    t = t * mask_l
                elif kx == 2:
                    t = t * mask_r
                taps.append(t)
        return jnp.concatenate(taps, axis=0)

    # residual branch: ReLU -> conv1 -> ReLU -> conv2  (DisBlock activates BEFORE c1)
    h = jnp.maximum(x, 0.0)
    h = jnp.dot(w1_ref[...], patches_3x3(h),
                preferred_element_type=jnp.float32) + b1_ref[...]
    h = jnp.maximum(h, 0.0)
    h = jnp.dot(w2_ref[...], patches_3x3(h),
                preferred_element_type=jnp.float32) + b2_ref[...]   # (Cout, HW)

    # shortcut branch on the raw (un-activated) input
    if learnable_sc:
        s = h + jnp.dot(wsc_ref[...], x,
                        preferred_element_type=jnp.float32) + bsc_ref[...]
    else:
        s = h + x[:h.shape[0], :]

    if downsample:
        # AvgPool2x2 as a VPU reduction via lane shifts (linear, so pooling the summed
        # branches equals pooling each branch separately).
        s1 = s + shift(s, 1)
        s = (s1 + shift(s1, W)) * 0.25

    out_ref[0] = s.astype(out_ref.dtype)


# --------------------------------- wrapper ------------------------------------

def dis_block(x, w1, b1, w2, b2, wsc, bsc, *, downsample=False):
    """DisBlock forward (d_spectral_norm=False). x: (N, Cin, H, W) f32, NCHW in/out."""
    n, cin, h, w = x.shape
    chid = w1.shape[0]
    cout = w2.shape[0]
    hw = h * w
    learnable_sc = (cin != cout) or downsample

    if wsc is None:
        wsc = jnp.zeros((cout, cin, 1, 1), x.dtype)
    if bsc is None:
        bsc = jnp.zeros((cout,), x.dtype)

    # pad channel dims to sublane granularity (8); zero channels are inert end-to-end.
    cin_p = _round_up(cin, 8)
    chid_p = _round_up(chid, 8)

    x_flat = jnp.pad(x.reshape(n, cin, hw), ((0, 0), (0, cin_p - cin), (0, 0)))

    def conv3x3_mat(wgt, co_p, ci_p):
        co, ci = wgt.shape[:2]
        wp = jnp.pad(wgt, ((0, co_p - co), (0, ci_p - ci), (0, 0), (0, 0)))
        # element [o, (ky*3+kx)*ci_p + c] = w[o, c, ky, kx]
        return jnp.transpose(wp, (0, 2, 3, 1)).reshape(co_p, 9 * ci_p)

    w1m = conv3x3_mat(w1, chid_p, cin_p)                               # (ChidP, 9*CinP)
    w2m = conv3x3_mat(w2, cout, chid_p)                                # (Cout, 9*ChidP)
    b1m = jnp.pad(b1, (0, chid_p - chid)).reshape(chid_p, 1)
    b2m = b2.reshape(cout, 1)
    wscm = jnp.pad(wsc.reshape(cout, cin), ((0, 0), (0, cin_p - cin)))  # (Cout, CinP)
    bscm = bsc.reshape(cout, 1)

    # x-boundary validity masks for the kx=0 / kx=2 taps (y bounds are handled by the
    # zero fill of the flat lane shift).
    xs = np.arange(hw) % w
    masks = jnp.asarray(
        np.stack([(xs >= 1), (xs <= w - 2)]).astype(np.float32)[:, None, :])  # (2,1,HW)

    kernel = functools.partial(_dis_block_kernel, H=h, W=w,
                               downsample=downsample, learnable_sc=learnable_sc)

    out_full = pl.pallas_call(
        kernel,
        out_shape=jax.ShapeDtypeStruct((n, cout, hw), jnp.float32),
        grid=(n,),
        in_specs=[
            pl.BlockSpec((1, cin_p, hw), lambda i: (i, 0, 0)),
            pl.BlockSpec((2, 1, hw), lambda i: (0, 0, 0)),
            pl.BlockSpec((chid_p, 9 * cin_p), lambda i: (0, 0)),
            pl.BlockSpec((chid_p, 1), lambda i: (0, 0)),
            pl.BlockSpec((cout, 9 * chid_p), lambda i: (0, 0)),
            pl.BlockSpec((cout, 1), lambda i: (0, 0)),
            pl.BlockSpec((cout, cin_p), lambda i: (0, 0)),
            pl.BlockSpec((cout, 1), lambda i: (0, 0)),
        ],
        out_specs=pl.BlockSpec((1, cout, hw), lambda i: (i, 0, 0)),
        compiler_params=pltpu.CompilerParams(dimension_semantics=("parallel",)),
    )(x_flat, masks, w1m, b1m, w2m, b2m, wscm, bscm)

    out = out_full.reshape(n, cout, h, w)
    if downsample:
        # compact the in-kernel 2x2 averages (cheap strided slice in XLA; keeps the
        # kernel free of non-128-aligned lane gathers).
        out = out[:, :, ::2, ::2]
    return out


# ----------------------------- pure-JAX reference ------------------------------

def _ref_forward(x, w1, b1, w2, b2, wsc, bsc, *, downsample=False):
    def conv(xx, ww, bb, pad):
        y = lax.conv_general_dilated(xx, ww, (1, 1), [(pad, pad), (pad, pad)],
                                     dimension_numbers=("NCHW", "OIHW", "NCHW"))
        return y + bb.reshape(1, -1, 1, 1)

    def avgpool(xx):
        return lax.reduce_window(xx, 0.0, lax.add, (1, 1, 2, 2), (1, 1, 2, 2),
                                 "VALID") / 4.0

    cin, cout = x.shape[1], w2.shape[0]
    learnable_sc = (cin != cout) or downsample

    h = jnp.maximum(x, 0.0)
    h = conv(h, w1, b1, 1)
    h = jnp.maximum(h, 0.0)
    h = conv(h, w2, b2, 1)
    if downsample:
        h = avgpool(h)
    sc = x
    if learnable_sc:
        sc = conv(x, wsc, bsc, 0)
        if downsample:
            sc = avgpool(sc)
    return h + sc


# ------------------------------------ main --------------------------------------

if __name__ == "__main__":
    N, Cin, Cout, H, W = 2, 4, 8, 16, 16
    Chid = Cin   # DisBlock default: hidden_channels = in_channels

    key = jax.random.PRNGKey(0)
    ks = jax.random.split(key, 7)
    x = jax.random.normal(ks[0], (N, Cin, H, W), jnp.float32)
    w1 = jax.random.normal(ks[1], (Chid, Cin, 3, 3), jnp.float32) * 0.1
    b1 = jax.random.normal(ks[2], (Chid,), jnp.float32) * 0.1
    w2 = jax.random.normal(ks[3], (Cout, Chid, 3, 3), jnp.float32) * 0.1
    b2 = jax.random.normal(ks[4], (Cout,), jnp.float32) * 0.1
    wsc = jax.random.normal(ks[5], (Cout, Cin, 1, 1), jnp.float32) * 0.1
    bsc = jax.random.normal(ks[6], (Cout,), jnp.float32) * 0.1

    fwd = jax.jit(dis_block, static_argnames=("downsample",))

    # downsample=True (typical discriminator configuration)
    out_ds = jax.block_until_ready(fwd(x, w1, b1, w2, b2, wsc, bsc, downsample=True))
    ref_ds = jax.block_until_ready(
        _ref_forward(x, w1, b1, w2, b2, wsc, bsc, downsample=True))
    assert out_ds.shape == (N, Cout, H // 2, W // 2), out_ds.shape
    np.testing.assert_allclose(np.asarray(out_ds), np.asarray(ref_ds),
                               rtol=1e-3, atol=1e-3)

    # downsample=False (learnable 1x1 shortcut, no pooling)
    out_nd = jax.block_until_ready(fwd(x, w1, b1, w2, b2, wsc, bsc, downsample=False))
    ref_nd = jax.block_until_ready(
        _ref_forward(x, w1, b1, w2, b2, wsc, bsc, downsample=False))
    assert out_nd.shape == (N, Cout, H, W), out_nd.shape
    np.testing.assert_allclose(np.asarray(out_nd), np.asarray(ref_nd),
                               rtol=1e-3, atol=1e-3)

    print("KERNEL_OK")
</pallas_src>

<mosaic_0001>
module attributes {stable_mosaic.version = 11 : i64} {
  func.func @_dis_block_kernel(%arg0: i32, %arg1: memref<1x8x256xf32, #tpu.memory_space<vmem>>, %arg2: memref<2x1x256xf32, #tpu.memory_space<vmem>>, %arg3: memref<8x72xf32, #tpu.memory_space<vmem>>, %arg4: memref<8x1xf32, #tpu.memory_space<vmem>>, %arg5: memref<8x72xf32, #tpu.memory_space<vmem>>, %arg6: memref<8x1xf32, #tpu.memory_space<vmem>>, %arg7: memref<8x8xf32, #tpu.memory_space<vmem>>, %arg8: memref<8x1xf32, #tpu.memory_space<vmem>>, %arg9: memref<1x8x256xf32, #tpu.memory_space<vmem>>) attributes {dimension_semantics = [#tpu.dimension_semantics<parallel>], iteration_bounds = array<i64: 2>, scalar_prefetch = 0 : i64, scratch_operands = 0 : i64, tpu.core_type = #tpu.core_type<tc>, window_params = [{transform_indices = @transform_0, window_bounds = array<i64: 1, 8, 256>}, {pipeline_mode = #tpu.pipeline_mode<synchronous>, transform_indices = @transform_1, window_bounds = array<i64: 2, 1, 256>}, {pipeline_mode = #tpu.pipeline_mode<synchronous>, transform_indices = @transform_2, window_bounds = array<i64: 8, 72>}, {pipeline_mode = #tpu.pipeline_mode<synchronous>, transform_indices = @transform_3, window_bounds = array<i64: 8, 1>}, {pipeline_mode = #tpu.pipeline_mode<synchronous>, transform_indices = @transform_4, window_bounds = array<i64: 8, 72>}, {pipeline_mode = #tpu.pipeline_mode<synchronous>, transform_indices = @transform_5, window_bounds = array<i64: 8, 1>}, {pipeline_mode = #tpu.pipeline_mode<synchronous>, transform_indices = @transform_6, window_bounds = array<i64: 8, 8>}, {pipeline_mode = #tpu.pipeline_mode<synchronous>, transform_indices = @transform_7, window_bounds = array<i64: 8, 1>}, {transform_indices = @transform_8, window_bounds = array<i64: 1, 8, 256>}]} {
    %c0 = arith.constant 0 : index
    %c0_0 = arith.constant 0 : index
    %c0_1 = arith.constant 0 : index
    %0 = vector.load %arg1[%c0, %c0_0, %c0_1] : memref<1x8x256xf32, #tpu.memory_space<vmem>>, vector<1x8x256xf32>
    %1 = vector.shape_cast %0 : vector<1x8x256xf32> to vector<8x256xf32>
    %c0_2 = arith.constant 0 : index
    %c0_3 = arith.constant 0 : index
    %c0_4 = arith.constant 0 : index
    %2 = vector.load %arg2[%c0_2, %c0_3, %c0_4] : memref<2x1x256xf32, #tpu.memory_space<vmem>>, vector<1x1x256xf32>
    %3 = vector.shape_cast %2 : vector<1x1x256xf32> to vector<1x256xf32>
    %c1 = arith.constant 1 : index
    %c0_5 = arith.constant 0 : index
    %c0_6 = arith.constant 0 : index
    %4 = vector.load %arg2[%c1, %c0_5, %c0_6] : memref<2x1x256xf32, #tpu.memory_space<vmem>>, vector<1x1x256xf32>
    %5 = vector.shape_cast %4 : vector<1x1x256xf32> to vector<1x256xf32>
    %cst = arith.constant 0.000000e+00 : f32
    %6 = vector.broadcast %cst : f32 to vector<8x256xf32>
    %7 = arith.maximumf %1, %6 : vector<8x256xf32>
    %c0_7 = arith.constant 0 : index
    %c0_8 = arith.constant 0 : index
    %8 = vector.load %arg3[%c0_7, %c0_8] : memref<8x72xf32, #tpu.memory_space<vmem>>, vector<8x72xf32>
    %cst_9 = arith.constant 0.000000e+00 : f32
    %9 = vector.broadcast %cst_9 : f32 to vector<8x17xf32>
    %10 = vector.extract_strided_slice %7 {offsets = [0, 0], sizes = [8, 239], strides = [1, 1]} : vector<8x256xf32> to vector<8x239xf32>
    %11 = tpu.concatenate %9, %10 in 1 : vector<8x17xf32>, vector<8x239xf32> -> vector<8x256xf32>
    %12 = vector.broadcast %3 : vector<1x256xf32> to vector<8x256xf32>
    %13 = arith.mulf %11, %12 : vector<8x256xf32>
    %cst_10 = arith.constant 0.000000e+00 : f32
    %14 = vector.broadcast %cst_10 : f32 to vector<8x16xf32>
    %15 = vector.extract_strided_slice %7 {offsets = [0, 0], sizes = [8, 240], strides = [1, 1]} : vector<8x256xf32> to vector<8x240xf32>
    %16 = tpu.concatenate %14, %15 in 1 : vector<8x16xf32>, vector<8x240xf32> -> vector<8x256xf32>
    %cst_11 = arith.constant 0.000000e+00 : f32
    %17 = vector.broadcast %cst_11 : f32 to vector<8x15xf32>
    %18 = vector.extract_strided_slice %7 {offsets = [0, 0], sizes = [8, 241], strides = [1, 1]} : vector<8x256xf32> to vector<8x241xf32>
    %19 = tpu.concatenate %17, %18 in 1 : vector<8x15xf32>, vector<8x241xf32> -> vector<8x256xf32>
    %20 = vector.broadcast %5 : vector<1x256xf32> to vector<8x256xf32>
    %21 = arith.mulf %19, %20 : vector<8x256xf32>
    %cst_12 = arith.constant 0.000000e+00 : f32
    %22 = vector.broadcast %cst_12 : f32 to vector<8x1xf32>
    %23 = vector.extract_strided_slice %7 {offsets = [0, 0], sizes = [8, 255], strides = [1, 1]} : vector<8x256xf32> to vector<8x255xf32>
    %24 = tpu.concatenate %22, %23 in 1 : vector<8x1xf32>, vector<8x255xf32> -> vector<8x256xf32>
    %25 = vector.broadcast %3 : vector<1x256xf32> to vector<8x256xf32>
    %26 = arith.mulf %24, %25 : vector<8x256xf32>
    %cst_13 = arith.constant 0.000000e+00 : f32
    %27 = vector.broadcast %cst_13 : f32 to vector<8x1xf32>
    %28 = vector.extract_strided_slice %7 {offsets = [0, 1], sizes = [8, 255], strides = [1, 1]} : vector<8x256xf32> to vector<8x255xf32>
    %29 = tpu.concatenate %28, %27 in 1 : vector<8x255xf32>, vector<8x1xf32> -> vector<8x256xf32>
    %30 = vector.broadcast %5 : vector<1x256xf32> to vector<8x256xf32>
    %31 = arith.mulf %29, %30 : vector<8x256xf32>
    %cst_14 = arith.constant 0.000000e+00 : f32
    %32 = vector.broadcast %cst_14 : f32 to vector<8x15xf32>
    %33 = vector.extract_strided_slice %7 {offsets = [0, 15], sizes = [8, 241], strides = [1, 1]} : vector<8x256xf32> to vector<8x241xf32>
    %34 = tpu.concatenate %33, %32 in 1 : vector<8x241xf32>, vector<8x15xf32> -> vector<8x256xf32>
    %35 = vector.broadcast %3 : vector<1x256xf32> to vector<8x256xf32>
    %36 = arith.mulf %34, %35 : vector<8x256xf32>
    %cst_15 = arith.constant 0.000000e+00 : f32
    %37 = vector.broadcast %cst_15 : f32 to vector<8x16xf32>
    %38 = vector.extract_strided_slice %7 {offsets = [0, 16], sizes = [8, 240], strides = [1, 1]} : vector<8x256xf32> to vector<8x240xf32>
    %39 = tpu.concatenate %38, %37 in 1 : vector<8x240xf32>, vector<8x16xf32> -> vector<8x256xf32>
    %cst_16 = arith.constant 0.000000e+00 : f32
    %40 = vector.broadcast %cst_16 : f32 to vector<8x17xf32>
    %41 = vector.extract_strided_slice %7 {offsets = [0, 17], sizes = [8, 239], strides = [1, 1]} : vector<8x256xf32> to vector<8x239xf32>
    %42 = tpu.concatenate %41, %40 in 1 : vector<8x239xf32>, vector<8x17xf32> -> vector<8x256xf32>
    %43 = vector.broadcast %5 : vector<1x256xf32> to vector<8x256xf32>
    %44 = arith.mulf %42, %43 : vector<8x256xf32>
    %45 = tpu.concatenate %13, %16, %21, %26, %7, %31, %36, %39, %44 in 0 : vector<8x256xf32>, vector<8x256xf32>, vector<8x256xf32>, vector<8x256xf32>, vector<8x256xf32>, vector<8x256xf32>, vector<8x256xf32>, vector<8x256xf32>, vector<8x256xf32> -> vector<72x256xf32>
    %cst_17 = arith.constant dense<0.000000e+00> : vector<8x256xf32>
    %46 = tpu.matmul %8, %45, %cst_17 {dimension_numbers = #tpu.dot_dimension_numbers<[1], [0], [0], [1], [0, 0, 1, 1], [], []>} : vector<8x72xf32>, vector<72x256xf32>, vector<8x256xf32> -> vector<8x256xf32>
    %c0_18 = arith.constant 0 : index
    %c0_19 = arith.constant 0 : index
    %47 = vector.load %arg4[%c0_18, %c0_19] : memref<8x1xf32, #tpu.memory_space<vmem>>, vector<8x1xf32>
    %48 = vector.broadcast %47 : vector<8x1xf32> to vector<8x256xf32>
    %49 = arith.addf %46, %48 : vector<8x256xf32>
    %cst_20 = arith.constant 0.000000e+00 : f32
    %50 = vector.broadcast %cst_20 : f32 to vector<8x256xf32>
    %51 = arith.maximumf %49, %50 : vector<8x256xf32>
    %c0_21 = arith.constant 0 : index
    %c0_22 = arith.constant 0 : index
    %52 = vector.load %arg5[%c0_21, %c0_22] : memref<8x72xf32, #tpu.memory_space<vmem>>, vector<8x72xf32>
    %cst_23 = arith.constant 0.000000e+00 : f32
    %53 = vector.broadcast %cst_23 : f32 to vector<8x17xf32>
    %54 = vector.extract_strided_slice %51 {offsets = [0, 0], sizes = [8, 239], strides = [1, 1]} : vector<8x256xf32> to vector<8x239xf32>
    %55 = tpu.concatenate %53, %54 in 1 : vector<8x17xf32>, vector<8x239xf32> -> vector<8x256xf32>
    %56 = vector.broadcast %3 : vector<1x256xf32> to vector<8x256xf32>
    %57 = arith.mulf %55, %56 : vector<8x256xf32>
    %cst_24 = arith.constant 0.000000e+00 : f32
    %58 = vector.broadcast %cst_24 : f32 to vector<8x16xf32>
    %59 = vector.extract_strided_slice %51 {offsets = [0, 0], sizes = [8, 240], strides = [1, 1]} : vector<8x256xf32> to vector<8x240xf32>
    %60 = tpu.concatenate %58, %59 in 1 : vector<8x16xf32>, vector<8x240xf32> -> vector<8x256xf32>
    %cst_25 = arith.constant 0.000000e+00 : f32
    %61 = vector.broadcast %cst_25 : f32 to vector<8x15xf32>
    %62 = vector.extract_strided_slice %51 {offsets = [0, 0], sizes = [8, 241], strides = [1, 1]} : vector<8x256xf32> to vector<8x241xf32>
    %63 = tpu.concatenate %61, %62 in 1 : vector<8x15xf32>, vector<8x241xf32> -> vector<8x256xf32>
    %64 = vector.broadcast %5 : vector<1x256xf32> to vector<8x256xf32>
    %65 = arith.mulf %63, %64 : vector<8x256xf32>
    %cst_26 = arith.constant 0.000000e+00 : f32
    %66 = vector.broadcast %cst_26 : f32 to vector<8x1xf32>
    %67 = vector.extract_strided_slice %51 {offsets = [0, 0], sizes = [8, 255], strides = [1, 1]} : vector<8x256xf32> to vector<8x255xf32>
    %68 = tpu.concatenate %66, %67 in 1 : vector<8x1xf32>, vector<8x255xf32> -> vector<8x256xf32>
    %69 = vector.broadcast %3 : vector<1x256xf32> to vector<8x256xf32>
    %70 = arith.mulf %68, %69 : vector<8x256xf32>
    %cst_27 = arith.constant 0.000000e+00 : f32
    %71 = vector.broadcast %cst_27 : f32 to vector<8x1xf32>
    %72 = vector.extract_strided_slice %51 {offsets = [0, 1], sizes = [8, 255], strides = [1, 1]} : vector<8x256xf32> to vector<8x255xf32>
    %73 = tpu.concatenate %72, %71 in 1 : vector<8x255xf32>, vector<8x1xf32> -> vector<8x256xf32>
    %74 = vector.broadcast %5 : vector<1x256xf32> to vector<8x256xf32>
    %75 = arith.mulf %73, %74 : vector<8x256xf32>
    %cst_28 = arith.constant 0.000000e+00 : f32
    %76 = vector.broadcast %cst_28 : f32 to vector<8x15xf32>
    %77 = vector.extract_strided_slice %51 {offsets = [0, 15], sizes = [8, 241], strides = [1, 1]} : vector<8x256xf32> to vector<8x241xf32>
    %78 = tpu.concatenate %77, %76 in 1 : vector<8x241xf32>, vector<8x15xf32> -> vector<8x256xf32>
    %79 = vector.broadcast %3 : vector<1x256xf32> to vector<8x256xf32>
    %80 = arith.mulf %78, %79 : vector<8x256xf32>
    %cst_29 = arith.constant 0.000000e+00 : f32
    %81 = vector.broadcast %cst_29 : f32 to vector<8x16xf32>
    %82 = vector.extract_strided_slice %51 {offsets = [0, 16], sizes = [8, 240], strides = [1, 1]} : vector<8x256xf32> to vector<8x240xf32>
    %83 = tpu.concatenate %82, %81 in 1 : vector<8x240xf32>, vector<8x16xf32> -> vector<8x256xf32>
    %cst_30 = arith.constant 0.000000e+00 : f32
    %84 = vector.broadcast %cst_30 : f32 to vector<8x17xf32>
    %85 = vector.extract_strided_slice %51 {offsets = [0, 17], sizes = [8, 239], strides = [1, 1]} : vector<8x256xf32> to vector<8x239xf32>
    %86 = tpu.concatenate %85, %84 in 1 : vector<8x239xf32>, vector<8x17xf32> -> vector<8x256xf32>
    %87 = vector.broadcast %5 : vector<1x256xf32> to vector<8x256xf32>
    %88 = arith.mulf %86, %87 : vector<8x256xf32>
    %89 = tpu.concatenate %57, %60, %65, %70, %51, %75, %80, %83, %88 in 0 : vector<8x256xf32>, vector<8x256xf32>, vector<8x256xf32>, vector<8x256xf32>, vector<8x256xf32>, vector<8x256xf32>, vector<8x256xf32>, vector<8x256xf32>, vector<8x256xf32> -> vector<72x256xf32>
    %cst_31 = arith.constant dense<0.000000e+00> : vector<8x256xf32>
    %90 = tpu.matmul %52, %89, %cst_31 {dimension_numbers = #tpu.dot_dimension_numbers<[1], [0], [0], [1], [0, 0, 1, 1], [], []>} : vector<8x72xf32>, vector<72x256xf32>, vector<8x256xf32> -> vector<8x256xf32>
    %c0_32 = arith.constant 0 : index
    %c0_33 = arith.constant 0 : index
    %91 = vector.load %arg6[%c0_32, %c0_33] : memref<8x1xf32, #tpu.memory_space<vmem>>, vector<8x1xf32>
    %92 = vector.broadcast %91 : vector<8x1xf32> to vector<8x256xf32>
    %93 = arith.addf %90, %92 : vector<8x256xf32>
    %c0_34 = arith.constant 0 : index
    %c0_35 = arith.constant 0 : index
    %94 = vector.load %arg7[%c0_34, %c0_35] : memref<8x8xf32, #tpu.memory_space<vmem>>, vector<8x8xf32>
    %cst_36 = arith.constant dense<0.000000e+00> : vector<8x256xf32>
    %95 = tpu.matmul %94, %1, %cst_36 {dimension_numbers = #tpu.dot_dimension_numbers<[1], [0], [0], [1], [0, 0, 1, 1], [], []>} : vector<8x8xf32>, vector<8x256xf32>, vector<8x256xf32> -> vector<8x256xf32>
    %96 = arith.addf %93, %95 : vector<8x256xf32>
    %c0_37 = arith.constant 0 : index
    %c0_38 = arith.constant 0 : index
    %97 = vector.load %arg8[%c0_37, %c0_38] : memref<8x1xf32, #tpu.memory_space<vmem>>, vector<8x1xf32>
    %98 = vector.broadcast %97 : vector<8x1xf32> to vector<8x256xf32>
    %99 = arith.addf %96, %98 : vector<8x256xf32>
    %cst_39 = arith.constant 0.000000e+00 : f32
    %100 = vector.broadcast %cst_39 : f32 to vector<8x1xf32>
    %101 = vector.extract_strided_slice %99 {offsets = [0, 1], sizes = [8, 255], strides = [1, 1]} : vector<8x256xf32> to vector<8x255xf32>
    %102 = tpu.concatenate %101, %100 in 1 : vector<8x255xf32>, vector<8x1xf32> -> vector<8x256xf32>
    %103 = arith.addf %99, %102 : vector<8x256xf32>
    %cst_40 = arith.constant 0.000000e+00 : f32
    %104 = vector.broadcast %cst_40 : f32 to vector<8x16xf32>
    %105 = vector.extract_strided_slice %103 {offsets = [0, 16], sizes = [8, 240], strides = [1, 1]} : vector<8x256xf32> to vector<8x240xf32>
    %106 = tpu.concatenate %105, %104 in 1 : vector<8x240xf32>, vector<8x16xf32> -> vector<8x256xf32>
    %107 = arith.addf %103, %106 : vector<8x256xf32>
    %cst_41 = arith.constant 2.500000e-01 : f32
    %108 = vector.broadcast %cst_41 : f32 to vector<8x256xf32>
    %109 = arith.mulf %107, %108 : vector<8x256xf32>
    %c0_42 = arith.constant 0 : index
    %c0_43 = arith.constant 0 : index
    %c0_44 = arith.constant 0 : index
    %110 = vector.load %arg9[%c0_42, %c0_43, %c0_44] : memref<1x8x256xf32, #tpu.memory_space<vmem>>, vector<1x8x256xf32>
    %111 = vector.shape_cast %110 : vector<1x8x256xf32> to vector<8x256xf32>
    %112 = vector.shape_cast %109 : vector<8x256xf32> to vector<1x8x256xf32>
    tpu.vector_store %arg9[%c0_42, %c0_43, %c0_44], %112 {strides = array<i32>} : memref<1x8x256xf32, #tpu.memory_space<vmem>>, vector<1x8x256xf32>,
    return
  }
  func.func @transform_0(%arg0: i32) -> (i32, i32, i32) {
    %c0_i32 = arith.constant 0 : i32
    %c0_i32_0 = arith.constant 0 : i32
    %c0_i32_1 = arith.constant 0 : i32
    return %arg0, %c0_i32, %c0_i32_0 : i32, i32, i32
  }
  func.func @transform_1(%arg0: i32) -> (i32, i32, i32) {
    %c0_i32 = arith.constant 0 : i32
    %c0_i32_0 = arith.constant 0 : i32
    %c0_i32_1 = arith.constant 0 : i32
    %c0_i32_2 = arith.constant 0 : i32
    return %c0_i32, %c0_i32_0, %c0_i32_1 : i32, i32, i32
  }
  func.func @transform_2(%arg0: i32) -> (i32, i32) {
    %c0_i32 = arith.constant 0 : i32
    %c0_i32_0 = arith.constant 0 : i32
    %c0_i32_1 = arith.constant 0 : i32
    return %c0_i32, %c0_i32_0 : i32, i32
  }
  func.func @transform_3(%arg0: i32) -> (i32, i32) {
    %c0_i32 = arith.constant 0 : i32
    %c0_i32_0 = arith.constant 0 : i32
    %c0_i32_1 = arith.constant 0 : i32
    return %c0_i32, %c0_i32_0 : i32, i32
  }
  func.func @transform_4(%arg0: i32) -> (i32, i32) {
    %c0_i32 = arith.constant 0 : i32
    %c0_i32_0 = arith.constant 0 : i32
    %c0_i32_1 = arith.constant 0 : i32
    return %c0_i32, %c0_i32_0 : i32, i32
  }
  func.func @transform_5(%arg0: i32) -> (i32, i32) {
    %c0_i32 = arith.constant 0 : i32
    %c0_i32_0 = arith.constant 0 : i32
    %c0_i32_1 = arith.constant 0 : i32
    return %c0_i32, %c0_i32_0 : i32, i32
  }
  func.func @transform_6(%arg0: i32) -> (i32, i32) {
    %c0_i32 = arith.constant 0 : i32
    %c0_i32_0 = arith.constant 0 : i32
    %c0_i32_1 = arith.constant 0 : i32
    return %c0_i32, %c0_i32_0 : i32, i32
  }
  func.func @transform_7(%arg0: i32) -> (i32, i32) {
    %c0_i32 = arith.constant 0 : i32
    %c0_i32_0 = arith.constant 0 : i32
    %c0_i32_1 = arith.constant 0 : i32
    return %c0_i32, %c0_i32_0 : i32, i32
  }
  func.func @transform_8(%arg0: i32) -> (i32, i32, i32) {
    %c0_i32 = arith.constant 0 : i32
    %c0_i32_0 = arith.constant 0 : i32
    %c0_i32_1 = arith.constant 0 : i32
    return %arg0, %c0_i32, %c0_i32_0 : i32, i32, i32
  }
}

</mosaic_0001>

<llo_original>
// kernel: dis_block.1
$region0: #{dis_block.1}
  #allocation0 [shape = 'u32[]', space=smem, size = 0x4, offset = 0x4, fixed_abs, tag = 'smem constant byte address 0x4 - core index']
  #allocation1 [shape = 'u32[144,128]{1,0:T(1,128)}', space=vmem, size = 0x12000, scoped, tag = 'internal scratch']
  %s0 = inlined_call_operand.vmem [shape: f32[2,8,256], index: 0, kind: input, shape index: {}]
  %s1 = inlined_call_operand.vmem [shape: f32[2,1,256], index: 1, kind: input, shape index: {}]
  %s2 = inlined_call_operand.vmem [shape: f32[8,72], index: 2, kind: input, shape index: {}]
  %s3 = inlined_call_operand.vmem [shape: f32[8,1], index: 3, kind: input, shape index: {}]
  %s4 = inlined_call_operand.vmem [shape: f32[8,72], index: 4, kind: input, shape index: {}]
  %s5 = inlined_call_operand.vmem [shape: f32[8,1], index: 5, kind: input, shape index: {}]
  %s6 = inlined_call_operand.vmem [shape: f32[8,8], index: 6, kind: input, shape index: {}]
  %s7 = inlined_call_operand.vmem [shape: f32[8,1], index: 7, kind: input, shape index: {}]
  %s8 = inlined_call_operand.vmem [shape: f32[2,8,256], index: 8, kind: output, shape index: {}]
  %s9 = sld [smem:[#allocation0]]
  $region65: #{dis_block.1} parent=0
    _
  %s11 = ssub.s32 1, %s9
  %s12 = scalar_select 0, %s11, %s9
  loop: start=0, step=1, limit=4
  $region2: #{dis_block.1} parent=0 // loop_pre_header
    _
  $region3: #{dis_block.1} parent=0 // loop_header
    %s14 = sphi 0, %s18
    %p15 = scmp.ge.s32.totalorder %s14, 4
    %s24 = sphi 0, %s26
    %s27 = sphi 0, %s24
    %s28 = sphi 0, %s27
    %s44 = sphi 0, %s28
    %s48 = sphi 0, %s48
    %s50 = sphi 0, %s48
    %s51 = sphi 0, %s50
    %s65 = sphi 0, %s51
    %s69 = sphi 0, %s69
    %s71 = sphi 0, %s69
    %s72 = sphi 0, %s71
    %s86 = sphi 0, %s72
    %s90 = sphi 0, %s90
    %s92 = sphi 0, %s90
    %s93 = sphi 0, %s92
    %s107 = sphi 0, %s93
    %s111 = sphi 0, %s111
    %s113 = sphi 0, %s111
    %s114 = sphi 0, %s113
    %s128 = sphi 0, %s114
    %s132 = sphi 0, %s132
    %s134 = sphi 0, %s132
    %s135 = sphi 0, %s134
    %s149 = sphi 0, %s135
    %s153 = sphi 0, %s153
    %s155 = sphi 0, %s153
    %s156 = sphi 0, %s155
    %s170 = sphi 0, %s156
    %s174 = sphi 0, %s174
    %s176 = sphi 0, %s174
    %s177 = sphi 0, %s176
    %s191 = sphi 0, %s177
    %s197 = sphi 0, %s199
    %s200 = sphi 0, %s197
    %s201 = sphi 0, %s200
    %s217 = sphi 0, %s201
  $region4: #{dis_block.1} parent=0 // loop_header_branch
    %17 = sbr.rel (%p15) target = $region8
  $region5: #{dis_block.1} parent=0 // loop_body
    %s19 = ssub.s32 %s14, 1
    %s20 = ssub.s32 %s14, 2
    %s21 = sadd.s32 %s14, 1
    %s22 = ssub.s32 %s14, %s21
    %p23 = scmp.eq.s32.totalorder %s22, 0
    %s25 = sadd.s32 %s24, 1
    %s26 = scalar_select %p23, %s24, %s25
    %p29 = pneg %p23
    %p30 = scmp.eq.s32.totalorder %s14, 1
    %p31 = por %p29, %p30
    %p32 = scmp.ne.s32.totalorder %s24, %s27
    %p33 = scmp.eq.s32.totalorder %s14, 0
    %p34 = por %p32, %p33
    %p35 = scmp.ne.s32.totalorder %s24, %s27
    %p36 = scmp.eq.s32.totalorder %s19, 1
    %p37 = por %p35, %p36
    %p38 = scmp.ne.s32.totalorder %s27, %s28
    %p39 = scmp.eq.s32.totalorder %s19, 0
    %p40 = por %p38, %p39
    %p41 = scmp.ne.s32.totalorder %s27, %s28
    %p42 = scmp.eq.s32.totalorder %s20, 1
    %p43 = por %p41, %p42
    %p45 = scmp.ne.s32.totalorder %s28, %s44
    %p46 = scmp.eq.s32.totalorder %s20, 0
    %p47 = por %p45, %p46
    %s49 = sadd.s32 %s48, 1
    %p52 = scmp.eq.s32.totalorder %s14, 1
    %p53 = scmp.ne.s32.totalorder %s48, %s50
    %p54 = scmp.eq.s32.totalorder %s14, 0
    %p55 = por %p53, %p54
    %p56 = scmp.ne.s32.totalorder %s48, %s50
    %p57 = scmp.eq.s32.totalorder %s19, 1
    %p58 = por %p56, %p57
    %p59 = scmp.ne.s32.totalorder %s50, %s51
    %p60 = scmp.eq.s32.totalorder %s19, 0
    %p61 = por %p59, %p60
    %p62 = scmp.ne.s32.totalorder %s50, %s51
    %p63 = scmp.eq.s32.totalorder %s20, 1
    %p64 = por %p62, %p63
    %p66 = scmp.ne.s32.totalorder %s51, %s65
    %p67 = scmp.eq.s32.totalorder %s20, 0
    %p68 = por %p66, %p67
    %s70 = sadd.s32 %s69, 1
    %p73 = scmp.eq.s32.totalorder %s14, 1
    %p74 = scmp.ne.s32.totalorder %s69, %s71
    %p75 = scmp.eq.s32.totalorder %s14, 0
    %p76 = por %p74, %p75
    %p77 = scmp.ne.s32.totalorder %s69, %s71
    %p78 = scmp.eq.s32.totalorder %s19, 1
    %p79 = por %p77, %p78
    %p80 = scmp.ne.s32.totalorder %s71, %s72
    %p81 = scmp.eq.s32.totalorder %s19, 0
    %p82 = por %p80, %p81
    %p83 = scmp.ne.s32.totalorder %s71, %s72
    %p84 = scmp.eq.s32.totalorder %s20, 1
    %p85 = por %p83, %p84
    %p87 = scmp.ne.s32.totalorder %s72, %s86
    %p88 = scmp.eq.s32.totalorder %s20, 0
    %p89 = por %p87, %p88
    %s91 = sadd.s32 %s90, 1
    %p94 = scmp.eq.s32.totalorder %s14, 1
    %p95 = scmp.ne.s32.totalorder %s90, %s92
    %p96 = scmp.eq.s32.totalorder %s14, 0
    %p97 = por %p95, %p96
    %p98 = scmp.ne.s32.totalorder %s90, %s92
    %p99 = scmp.eq.s32.totalorder %s19, 1
    %p100 = por %p98, %p99
    %p101 = scmp.ne.s32.totalorder %s92, %s93
    %p102 = scmp.eq.s32.totalorder %s19, 0
    %p103 = por %p101, %p102
    %p104 = scmp.ne.s32.totalorder %s92, %s93
    %p105 = scmp.eq.s32.totalorder %s20, 1
    %p106 = por %p104, %p105
    %p108 = scmp.ne.s32.totalorder %s93, %s107
    %p109 = scmp.eq.s32.totalorder %s20, 0
    %p110 = por %p108, %p109
    %s112 = sadd.s32 %s111, 1
    %p115 = scmp.eq.s32.totalorder %s14, 1
    %p116 = scmp.ne.s32.totalorder %s111, %s113
    %p117 = scmp.eq.s32.totalorder %s14, 0
    %p118 = por %p116, %p117
    %p119 = scmp.ne.s32.totalorder %s111, %s113
    %p120 = scmp.eq.s32.totalorder %s19, 1
    %p121 = por %p119, %p120
    %p122 = scmp.ne.s32.totalorder %s113, %s114
    %p123 = scmp.eq.s32.totalorder %s19, 0
    %p124 = por %p122, %p123
    %p125 = scmp.ne.s32.totalorder %s113, %s114
    %p126 = scmp.eq.s32.totalorder %s20, 1
    %p127 = por %p125, %p126
    %p129 = scmp.ne.s32.totalorder %s114, %s128
    %p130 = scmp.eq.s32.totalorder %s20, 0
    %p131 = por %p129, %p130
    %s133 = sadd.s32 %s132, 1
    %p136 = scmp.eq.s32.totalorder %s14, 1
    %p137 = scmp.ne.s32.totalorder %s132, %s134
    %p138 = scmp.eq.s32.totalorder %s14, 0
    %p139 = por %p137, %p138
    %p140 = scmp.ne.s32.totalorder %s132, %s134
    %p141 = scmp.eq.s32.totalorder %s19, 1
    %p142 = por %p140, %p141
    %p143 = scmp.ne.s32.totalorder %s134, %s135
    %p144 = scmp.eq.s32.totalorder %s19, 0
    %p145 = por %p143, %p144
    %p146 = scmp.ne.s32.totalorder %s134, %s135
    %p147 = scmp.eq.s32.totalorder %s20, 1
    %p148 = por %p146, %p147
    %p150 = scmp.ne.s32.totalorder %s135, %s149
    %p151 = scmp.eq.s32.totalorder %s20, 0
    %p152 = por %p150, %p151
    %s154 = sadd.s32 %s153, 1
    %p157 = scmp.eq.s32.totalorder %s14, 1
    %p158 = scmp.ne.s32.totalorder %s153, %s155
    %p159 = scmp.eq.s32.totalorder %s14, 0
    %p160 = por %p158, %p159
    %p161 = scmp.ne.s32.totalorder %s153, %s155
    %p162 = scmp.eq.s32.totalorder %s19, 1
    %p163 = por %p161, %p162
    %p164 = scmp.ne.s32.totalorder %s155, %s156
    %p165 = scmp.eq.s32.totalorder %s19, 0
    %p166 = por %p164, %p165
    %p167 = scmp.ne.s32.totalorder %s155, %s156
    %p168 = scmp.eq.s32.totalorder %s20, 1
    %p169 = por %p167, %p168
    %p171 = scmp.ne.s32.totalorder %s156, %s170
    %p172 = scmp.eq.s32.totalorder %s20, 0
    %p173 = por %p171, %p172
    %s175 = sadd.s32 %s174, 1
    %p178 = scmp.eq.s32.totalorder %s14, 1
    %p179 = scmp.ne.s32.totalorder %s174, %s176
    %p180 = scmp.eq.s32.totalorder %s14, 0
    %p181 = por %p179, %p180
    %p182 = scmp.ne.s32.totalorder %s174, %s176
    %p183 = scmp.eq.s32.totalorder %s19, 1
    %p184 = por %p182, %p183
    %p185 = scmp.ne.s32.totalorder %s176, %s177
    %p186 = scmp.eq.s32.totalorder %s19, 0
    %p187 = por %p185, %p186
    %p188 = scmp.ne.s32.totalorder %s176, %s177
    %p189 = scmp.eq.s32.totalorder %s20, 1
    %p190 = por %p188, %p189
    %p192 = scmp.ne.s32.totalorder %s177, %s191
    %p193 = scmp.eq.s32.totalorder %s20, 0
    %p194 = por %p192, %p193
    %s195 = ssub.s32 %s14, %s21
    %p196 = scmp.eq.s32.totalorder %s195, 0
    %s198 = sadd.s32 %s197, 1
    %s199 = scalar_select %p196, %s197, %s198
    %p202 = pneg %p196
    %p203 = scmp.eq.s32.totalorder %s14, 1
    %p204 = por %p202, %p203
    %p205 = scmp.ne.s32.totalorder %s197, %s200
    %p206 = scmp.eq.s32.totalorder %s14, 0
    %p207 = por %p205, %p206
    %p208 = scmp.ne.s32.totalorder %s197, %s200
    %p209 = scmp.eq.s32.totalorder %s19, 1
    %p210 = por %p208, %p209
    %p211 = scmp.ne.s32.totalorder %s200, %s201
    %p212 = scmp.eq.s32.totalorder %s19, 0
    %p213 = por %p211, %p212
    %p214 = scmp.ne.s32.totalorder %s200, %s201
    %p215 = scmp.eq.s32.totalorder %s20, 1
    %p216 = por %p214, %p215
    %p218 = scmp.ne.s32.totalorder %s201, %s217
    %p219 = scmp.eq.s32.totalorder %s20, 0
    %p220 = por %p218, %p219
    %p221 = scmp.le.s32.totalorder 1, %s14
    %p222 = scmp.lt.s32.totalorder %s14, 3
    %p223 = pnand %p221, %p222
    %p224 = pneg %p223
    // Predicated region
    $region9: #{dis_block.1} parent=5 // pred_check
      _
    $region10: #{dis_block.1} parent=5 // pred_check_branch
      %226 = sbr.rel (%p223) target = $region12
    $region11: #{dis_block.1} parent=5 // pred_region
      %s227 = ssub.s32 %s14, 1
      // Predicated region
      $region13: #{dis_block.1} parent=11 // pred_check
        %p228 = pneg %p61
      $region14: #{dis_block.1} parent=11 // pred_check_branch
        %230 = sbr.rel (%p228) target = $region16
      $region15: #{dis_block.1} parent=11 // pred_region
        _
      $region16: #{dis_block.1} parent=11 // pred_fallthru
        _
      // Predicated region
      $region17: #{dis_block.1} parent=11 // pred_check
        %p231 = pneg %p82
      $region18: #{dis_block.1} parent=11 // pred_check_branch
        %233 = sbr.rel (%p231) target = $region20
      $region19: #{dis_block.1} parent=11 // pred_region
        _
      $region20: #{dis_block.1} parent=11 // pred_fallthru
        _
      // Predicated region
      $region21: #{dis_block.1} parent=11 // pred_check
        %p234 = pneg %p103
      $region22: #{dis_block.1} parent=11 // pred_check_branch
        %236 = sbr.rel (%p234) target = $region24
      $region23: #{dis_block.1} parent=11 // pred_region
        _
      $region24: #{dis_block.1} parent=11 // pred_fallthru
        _
      // Predicated region
      $region25: #{dis_block.1} parent=11 // pred_check
        %p237 = pneg %p124
      $region26: #{dis_block.1} parent=11 // pred_check_branch
        %239 = sbr.rel (%p237) target = $region28
      $region27: #{dis_block.1} parent=11 // pred_region
        _
      $region28: #{dis_block.1} parent=11 // pred_fallthru
        _
      // Predicated region
      $region29: #{dis_block.1} parent=11 // pred_check
        %p240 = pneg %p145
      $region30: #{dis_block.1} parent=11 // pred_check_branch
        %242 = sbr.rel (%p240) target = $region32
      $region31: #{dis_block.1} parent=11 // pred_region
        _
      $region32: #{dis_block.1} parent=11 // pred_fallthru
        _
      // Predicated region
      $region33: #{dis_block.1} parent=11 // pred_check
        %p243 = pneg %p166
      $region34: #{dis_block.1} parent=11 // pred_check_branch
        %245 = sbr.rel (%p243) target = $region36
      $region35: #{dis_block.1} parent=11 // pred_region
        _
      $region36: #{dis_block.1} parent=11 // pred_fallthru
        _
      // Predicated region
      $region37: #{dis_block.1} parent=11 // pred_check
        %p246 = pneg %p187
      $region38: #{dis_block.1} parent=11 // pred_check_branch
        %248 = sbr.rel (%p246) target = $region40
      $region39: #{dis_block.1} parent=11 // pred_region
        _
      $region40: #{dis_block.1} parent=11 // pred_fallthru
        _
    $region12: #{dis_block.1} parent=5 // pred_fallthru
      _
    %p249 = scmp.lt.s32.totalorder %s14, 2
    // Predicated region
    $region41: #{dis_block.1} parent=5 // pred_check
      %p250 = pneg %p249
    $region42: #{dis_block.1} parent=5 // pred_check_branch
      %252 = sbr.rel (%p250) target = $region44
    $region43: #{dis_block.1} parent=5 // pred_region
      // Predicated region
      $region45: #{dis_block.1} parent=43 // pred_check
        %p253 = pneg %p34
      $region46: #{dis_block.1} parent=43 // pred_check_branch
        %255 = sbr.rel (%p253) target = $region48
      $region47: #{dis_block.1} parent=43 // pred_region
        %p256 = scmp.lt.s32.totalorder %s14, 1
        %s257 = scalar_select %p256, %s14, 1
        %s258 = smul.addr %s257, 2
        %s259 = smul.addr %s258, 8
        %s260 = scalar_lea.vmem %s0, %s259
      $region48: #{dis_block.1} parent=43 // pred_fallthru
        _
    $region44: #{dis_block.1} parent=5 // pred_fallthru
      _
    %p261 = scmp.le.s32.totalorder 1, %s14
    %p262 = scmp.lt.s32.totalorder %s14, 3
    %p263 = pnand %p261, %p262
    %p264 = pneg %p263
    // Predicated region
    $region49: #{dis_block.1} parent=5 // pred_check
      _
    $region50: #{dis_block.1} parent=5 // pred_check_branch
      %266 = sbr.rel (%p263) target = $region52
    $region51: #{dis_block.1} parent=5 // pred_region
      %s267 = ssub.s32 %s14, 1
      %p268 = scmp.lt.s32.totalorder %s19, 1
      %s269 = scalar_select %p268, %s19, 1
      %s270 = smul.addr %s269, 2
      %s271 = smul.addr %s270, 8
      %s272 = scalar_lea.vmem %s0, %s271
      %p273 = pneg %p40
      %p274 = pneg %p37
      %p275 = pneg %p61
      %p276 = pneg %p58
      %p277 = pneg %p82
      %p278 = pneg %p79
      %p279 = pneg %p103
      %p280 = pneg %p100
      %p281 = pneg %p124
      %p282 = pneg %p121
      %p283 = pneg %p145
      %p284 = pneg %p142
      %p285 = pneg %p166
      %p286 = pneg %p163
      %p287 = pneg %p187
      %p288 = pneg %p184
      %p289 = pneg %p213
      %p290 = pneg %p210
      %p291 = scmp.lt.s32.totalorder %s19, 1
      %s292 = scalar_select %p291, %s19, 1
      %s293 = smul.addr %s292, 2
      %s294 = smul.addr %s293, 8
      %s295 = scalar_lea.vmem %s8, %s294
      %p296 = scmp.lt.s32.totalorder %s19, 1
      %s297 = scalar_select %p296, %s19, 1
      %s298 = smul.addr %s297, 2
      %s299 = smul.addr %s298, 8
      %s300 = scalar_lea.vmem %s0, %s299
      %p301 = scmp.lt.s32.totalorder %s19, 1
      %s302 = scalar_select %p301, %s19, 1
      %s303 = smul.addr %s302, 2
      %s304 = smul.addr %s303, 8
      %s305 = scalar_lea.vmem %s8, %s304
      %v306 = vld [vmem:[%s300] sm:$0xff]
      %v307 = vld [vmem:[%s300 + $0x8] sm:$0xff]
      %v308 = vld [vmem:[%s1] sm:$0x3]
      %s309 = scalar_lea.vmem %s1, 2
      %v310 = vld [vmem:[%s309] sm:$0x3]
      %v311 = vmax.f32 %v306, 0.0
      %v312 = vmax.f32 %v307, 0.0
      %v313 = vld [vmem:[%s2] sm:$0xff]
      %316 = vrot.lane.b32.xlu0 %v311, 17
      %v317 = vpop.permute.xlu0 %316
      %318 = vrot.lane.b32.xlu0 %v312, 17
      %v319 = vpop.permute.xlu0 %318
      %vm320 = vcmask 138240
      %v321 = vsel %vm320, %v317, %v319
      %v324 = vsel %vm320, 0.0, %v317
      %v326 = vlaneseq
      %v327 = vshrl.u32 %v326, 7
      %v328 = vsub.s32 0, %v327
      %v329 = vrot.slane %v308, %v328
      %v330 = vlaneseq
      %v331 = vshrl.u32 %v330, 7
      %v332 = vsub.s32 1, %v331
      %v333 = vrot.slane %v308, %v332
      %v336 = vmul.f32 %v324, %v329
      %v337 = vmul.f32 %v321, %v333
      %338 = vrot.lane.b32.xlu0 %v311, 16
      %v339 = vpop.permute.xlu0 %338
      %340 = vrot.lane.b32.xlu0 %v312, 16
      %v341 = vpop.permute.xlu0 %340
      %vm342 = vcmask 130048
      %v343 = vsel %vm342, %v339, %v341
      %v346 = vsel %vm342, 0.0, %v339
      %347 = vrot.lane.b32.xlu0 %v311, 15
      %v348 = vpop.permute.xlu0 %347
      %349 = vrot.lane.b32.xlu0 %v312, 15
      %v350 = vpop.permute.xlu0 %349
      %vm351 = vcmask 121856
      %v352 = vsel %vm351, %v348, %v350
      %v355 = vsel %vm351, 0.0, %v348
      %v357 = vlaneseq
      %v358 = vshrl.u32 %v357, 7
      %v359 = vsub.s32 0, %v358
      %v360 = vrot.slane %v310, %v359
      %v361 = vlaneseq
      %v362 = vshrl.u32 %v361, 7
      %v363 = vsub.s32 1, %v362
      %v364 = vrot.slane %v310, %v363
      %v367 = vmul.f32 %v355, %v360
      %v368 = vmul.f32 %v352, %v364
      %369 = vrot.lane.b32.xlu0 %v311, 1
      %v370 = vpop.permute.xlu0 %369
      %371 = vrot.lane.b32.xlu0 %v312, 1
      %v372 = vpop.permute.xlu0 %371
      %vm373 = vcmask 7168
      %v374 = vsel %vm373, %v370, %v372
      %v377 = vsel %vm373, 0.0, %v370
      %v378 = vmul.f32 %v377, %v329
      %v379 = vmul.f32 %v374, %v333
      %380 = vrot.lane.b32.xlu0 %v311, 127
      %v381 = vpop.permute.xlu0 %380
      %382 = vrot.lane.b32.xlu0 %v312, 127
      %v383 = vpop.permute.xlu0 %382
      %vm384 = vcmask 1039360
      %v385 = vsel %vm384, %v381, %v383
      %v388 = vsel %vm384, %v383, 0.0
      %v389 = vmul.f32 %v385, %v360
      %v390 = vmul.f32 %v388, %v364
      %391 = vrot.lane.b32.xlu0 %v311, 113
      %v392 = vpop.permute.xlu0 %391
      %393 = vrot.lane.b32.xlu0 %v312, 113
      %v394 = vpop.permute.xlu0 %393
      %vm395 = vcmask 924672
      %v396 = vsel %vm395, %v392, %v394
      %v399 = vsel %vm395, %v394, 0.0
      %v400 = vmul.f32 %v396, %v329
      %v401 = vmul.f32 %v399, %v333
      %402 = vrot.lane.b32.xlu0 %v311, 112
      %v403 = vpop.permute.xlu0 %402
      %404 = vrot.lane.b32.xlu0 %v312, 112
      %v405 = vpop.permute.xlu0 %404
      %vm406 = vcmask 916480
      %v407 = vsel %vm406, %v403, %v405
      %v410 = vsel %vm406, %v405, 0.0
      %411 = vrot.lane.b32.xlu0 %v311, 111
      %v412 = vpop.permute.xlu0 %411
      %413 = vrot.lane.b32.xlu0 %v312, 111
      %v414 = vpop.permute.xlu0 %413
      %vm415 = vcmask 908288
      %v416 = vsel %vm415, %v412, %v414
      %v419 = vsel %vm415, %v414, 0.0
      %v420 = vmul.f32 %v416, %v360
      %v421 = vmul.f32 %v419, %v364
      %v422 = vld [vmem:[%s3] sm:$0xff]
      %424 = vset.pattern.permute.xlu0 0
      %425 = vperm.xlu0 %424, %v422
      %v426 = vpop.permute.xlu0 %425
      %vm428 = vcmask 588800
      %v430 = vsel %vm428, %v313, 0
      %432 = vmatprep.subr.mxu0 0.0
      %433 = vmatpush1.msra.mxu0 0.0
      %434 = vmatprep.subr.mxu0 0.0
      %435 = vmatpush1.msra.mxu0 0.0
      %436 = vmatprep.subr.mxu0 0.0
      %437 = vmatpush1.msra.mxu0 0.0
      %438 = vmatprep.subr.mxu0 0.0
      %439 = vmatpush1.msra.mxu0 0.0
      %440 = vmatprep.subr.mxu0 0.0
      %441 = vmatpush1.msra.mxu0 0.0
      %442 = vmatprep.subr.mxu0 0.0
      %443 = vmatpush1.msra.mxu0 0.0
      %444 = vmatprep.subr.mxu0 0.0
      %445 = vmatpush1.msra.mxu0 0.0
      %446 = vmatprep.subr.mxu0 %v421
      %447 = vmatpush1.msra.mxu0 %v420
      %448 = vmatprep.subr.mxu0 %v410
      %449 = vmatpush1.msra.mxu0 %v407
      %450 = vmatprep.subr.mxu0 %v401
      %451 = vmatpush1.msra.mxu0 %v400
      %452 = vmatprep.subr.mxu0 %v390
      %453 = vmatpush1.msra.mxu0 %v389
      %454 = vmatprep.subr.mxu0 %v312
      %455 = vmatpush1.msra.mxu0 %v311
      %456 = vmatprep.subr.mxu0 %v379
      %457 = vmatpush1.msra.mxu0 %v378
      %458 = vmatprep.subr.mxu0 %v368
      %459 = vmatpush1.msra.mxu0 %v367
      %460 = vmatprep.subr.mxu0 %v343
      %461 = vmatpush1.msra.mxu0 %v346
      %462 = vmatprep.subr.mxu0 %v337
      %463 = vmatpush1.msra.mxu0 %v336
      %464 = vmatprep.subr.mxu0 0.0
      %465 = vmatpush2.msra.mxu0 0.0
      %466 = vmatprep.subr.mxu0 0.0
      %467 = vmatpush2.msra.mxu0 0.0
      %468 = vmatprep.subr.mxu0 0.0
      %469 = vmatpush2.msra.mxu0 0.0
      %470 = vmatprep.subr.mxu0 0.0
      %471 = vmatpush2.msra.mxu0 0.0
      %472 = vmatprep.subr.mxu0 0.0
      %473 = vmatpush2.msra.mxu0 0.0
      %474 = vmatprep.subr.mxu0 0.0
      %475 = vmatpush2.msra.mxu0 0.0
      %476 = vmatprep.subr.mxu0 0.0
      %477 = vmatpush2.msra.mxu0 0.0
      %478 = vmatprep.subr.mxu0 0.0
      %479 = vmatpush2.msra.mxu0 0.0
      %480 = vmatprep.subr.mxu0 0.0
      %481 = vmatpush2.msra.mxu0 0.0
      %482 = vmatprep.subr.mxu0 0.0
      %483 = vmatpush2.msra.mxu0 0.0
      %484 = vmatprep.subr.mxu0 0.0
      %485 = vmatpush2.msra.mxu0 0.0
      %486 = vmatprep.subr.mxu0 0.0
      %487 = vmatpush2.msra.mxu0 0.0
      %488 = vmatprep.subr.mxu0 0.0
      %489 = vmatpush2.msra.mxu0 0.0
      %490 = vmatprep.subr.mxu0 0.0
      %491 = vmatpush2.msra.mxu0 0.0
      %492 = vmatprep.subr.mxu0 0.0
      %493 = vmatpush2.msra.mxu0 0.0
      %494 = vmatprep.subr.mxu0 0.0
      %495 = vmatpush2.msra.mxu0 0.0
      %496 = vmatprep.mubr.f32.mxu0 0.0
      %497 = vmatmul.mubr.f32.gmra.mxu0 %v430
      %v498 = vpop.f32.mrf.mxu0
      %v499 = vadd.f32 %v426, %v498
      %v500 = vpop.f32.mrf.mxu0
      %v501 = vadd.f32 %v426, %v500
      %502 = vdwg.mxu0
      %v503 = vmax.f32 %v499, 0.0
      %v504 = vmax.f32 %v501, 0.0
      %v505 = vld [vmem:[%s4] sm:$0xff]
      %508 = vrot.lane.b32.xlu0 %v503, 17
      %v509 = vpop.permute.xlu0 %508
      %510 = vrot.lane.b32.xlu0 %v504, 17
      %v511 = vpop.permute.xlu0 %510
      %v512 = vsel %vm320, %v509, %v511
      %v515 = vsel %vm320, 0.0, %v509
      %v516 = vmul.f32 %v515, %v329
      %v517 = vmul.f32 %v512, %v333
      %518 = vrot.lane.b32.xlu0 %v503, 16
      %v519 = vpop.permute.xlu0 %518
      %520 = vrot.lane.b32.xlu0 %v504, 16
      %v521 = vpop.permute.xlu0 %520
      %v522 = vsel %vm342, %v519, %v521
      %v525 = vsel %vm342, 0.0, %v519
      %526 = vrot.lane.b32.xlu0 %v503, 15
      %v527 = vpop.permute.xlu0 %526
      %528 = vrot.lane.b32.xlu0 %v504, 15
      %v529 = vpop.permute.xlu0 %528
      %v530 = vsel %vm351, %v527, %v529
      %v533 = vsel %vm351, 0.0, %v527
      %v534 = vmul.f32 %v533, %v360
      %v535 = vmul.f32 %v530, %v364
      %536 = vrot.lane.b32.xlu0 %v503, 1
      %v537 = vpop.permute.xlu0 %536
      %538 = vrot.lane.b32.xlu0 %v504, 1
      %v539 = vpop.permute.xlu0 %538
      %v540 = vsel %vm373, %v537, %v539
      %v543 = vsel %vm373, 0.0, %v537
      %v544 = vmul.f32 %v543, %v329
      %v545 = vmul.f32 %v540, %v333
      %546 = vrot.lane.b32.xlu0 %v503, 127
      %v547 = vpop.permute.xlu0 %546
      %548 = vrot.lane.b32.xlu0 %v504, 127
      %v549 = vpop.permute.xlu0 %548
      %v550 = vsel %vm384, %v547, %v549
      %v553 = vsel %vm384, %v549, 0.0
      %v554 = vmul.f32 %v550, %v360
      %v555 = vmul.f32 %v553, %v364
      %556 = vrot.lane.b32.xlu0 %v503, 113
      %v557 = vpop.permute.xlu0 %556
      %558 = vrot.lane.b32.xlu0 %v504, 113
      %v559 = vpop.permute.xlu0 %558
      %v560 = vsel %vm395, %v557, %v559
      %v563 = vsel %vm395, %v559, 0.0
      %v564 = vmul.f32 %v560, %v329
      %v565 = vmul.f32 %v563, %v333
      %566 = vrot.lane.b32.xlu0 %v503, 112
      %v567 = vpop.permute.xlu0 %566
      %568 = vrot.lane.b32.xlu0 %v504, 112
      %v569 = vpop.permute.xlu0 %568
      %v570 = vsel %vm406, %v567, %v569
      %v573 = vsel %vm406, %v569, 0.0
      %574 = vrot.lane.b32.xlu0 %v503, 111
      %v575 = vpop.permute.xlu0 %574
      %576 = vrot.lane.b32.xlu0 %v504, 111
      %v577 = vpop.permute.xlu0 %576
      %v578 = vsel %vm415, %v575, %v577
      %v581 = vsel %vm415, %v577, 0.0
      %v582 = vmul.f32 %v578, %v360
      %v583 = vmul.f32 %v581, %v364
      %v584 = vld [vmem:[%s5] sm:$0xff]
      %586 = vset.pattern.permute.xlu0 0
      %587 = vperm.xlu0 %586, %v584
      %v588 = vpop.permute.xlu0 %587
      %v591 = vsel %vm428, %v505, 0
      %593 = vmatprep.subr.mxu0 0.0
      %594 = vmatpush1.msra.mxu0 0.0
      %595 = vmatprep.subr.mxu0 0.0
      %596 = vmatpush1.msra.mxu0 0.0
      %597 = vmatprep.subr.mxu0 0.0
      %598 = vmatpush1.msra.mxu0 0.0
      %599 = vmatprep.subr.mxu0 0.0
      %600 = vmatpush1.msra.mxu0 0.0
      %601 = vmatprep.subr.mxu0 0.0
      %602 = vmatpush1.msra.mxu0 0.0
      %603 = vmatprep.subr.mxu0 0.0
      %604 = vmatpush1.msra.mxu0 0.0
      %605 = vmatprep.subr.mxu0 0.0
      %606 = vmatpush1.msra.mxu0 0.0
      %607 = vmatprep.subr.mxu0 %v583
      %608 = vmatpush1.msra.mxu0 %v582
      %609 = vmatprep.subr.mxu0 %v573
      %610 = vmatpush1.msra.mxu0 %v570
      %611 = vmatprep.subr.mxu0 %v565
      %612 = vmatpush1.msra.mxu0 %v564
      %613 = vmatprep.subr.mxu0 %v555
      %614 = vmatpush1.msra.mxu0 %v554
      %615 = vmatprep.subr.mxu0 %v504
      %616 = vmatpush1.msra.mxu0 %v503
      %617 = vmatprep.subr.mxu0 %v545
      %618 = vmatpush1.msra.mxu0 %v544
      %619 = vmatprep.subr.mxu0 %v535
      %620 = vmatpush1.msra.mxu0 %v534
      %621 = vmatprep.subr.mxu0 %v522
      %622 = vmatpush1.msra.mxu0 %v525
      %623 = vmatprep.subr.mxu0 %v517
      %624 = vmatpush1.msra.mxu0 %v516
      %625 = vmatprep.subr.mxu0 0.0
      %626 = vmatpush2.msra.mxu0 0.0
      %627 = vmatprep.subr.mxu0 0.0
      %628 = vmatpush2.msra.mxu0 0.0
      %629 = vmatprep.subr.mxu0 0.0
      %630 = vmatpush2.msra.mxu0 0.0
      %631 = vmatprep.subr.mxu0 0.0
      %632 = vmatpush2.msra.mxu0 0.0
      %633 = vmatprep.subr.mxu0 0.0
      %634 = vmatpush2.msra.mxu0 0.0
      %635 = vmatprep.subr.mxu0 0.0
      %636 = vmatpush2.msra.mxu0 0.0
      %637 = vmatprep.subr.mxu0 0.0
      %638 = vmatpush2.msra.mxu0 0.0
      %639 = vmatprep.subr.mxu0 0.0
      %640 = vmatpush2.msra.mxu0 0.0
      %641 = vmatprep.subr.mxu0 0.0
      %642 = vmatpush2.msra.mxu0 0.0
      %643 = vmatprep.subr.mxu0 0.0
      %644 = vmatpush2.msra.mxu0 0.0
      %645 = vmatprep.subr.mxu0 0.0
      %646 = vmatpush2.msra.mxu0 0.0
      %647 = vmatprep.subr.mxu0 0.0
      %648 = vmatpush2.msra.mxu0 0.0
      %649 = vmatprep.subr.mxu0 0.0
      %650 = vmatpush2.msra.mxu0 0.0
      %651 = vmatprep.subr.mxu0 0.0
      %652 = vmatpush2.msra.mxu0 0.0
      %653 = vmatprep.subr.mxu0 0.0
      %654 = vmatpush2.msra.mxu0 0.0
      %655 = vmatprep.subr.mxu0 0.0
      %656 = vmatpush2.msra.mxu0 0.0
      %657 = vmatprep.mubr.f32.mxu0 0.0
      %658 = vmatmul.mubr.f32.gmra.mxu0 %v591
      %v659 = vpop.f32.mrf.mxu0
      %v660 = vadd.f32 %v588, %v659
      %v661 = vpop.f32.mrf.mxu0
      %v662 = vadd.f32 %v588, %v661
      %663 = vdwg.mxu0
      %v664 = vld [vmem:[%s6] sm:$0xff]
      %vm665 = vcmask 64512
      %v667 = vsel %vm665, %v664, 0
      %669 = vmatprep.subr.mxu0 0.0
      %670 = vmatpush1.msra.mxu0 0.0
      %671 = vmatprep.subr.mxu0 0.0
      %672 = vmatpush1.msra.mxu0 0.0
      %673 = vmatprep.subr.mxu0 0.0
      %674 = vmatpush1.msra.mxu0 0.0
      %675 = vmatprep.subr.mxu0 0.0
      %676 = vmatpush1.msra.mxu0 0.0
      %677 = vmatprep.subr.mxu0 0.0
      %678 = vmatpush1.msra.mxu0 0.0
      %679 = vmatprep.subr.mxu0 0.0
      %680 = vmatpush1.msra.mxu0 0.0
      %681 = vmatprep.subr.mxu0 0.0
      %682 = vmatpush1.msra.mxu0 0.0
      %683 = vmatprep.subr.mxu0 0.0
      %684 = vmatpush1.msra.mxu0 0.0
      %685 = vmatprep.subr.mxu0 0.0
      %686 = vmatpush1.msra.mxu0 0.0
      %687 = vmatprep.subr.mxu0 0.0
      %688 = vmatpush1.msra.mxu0 0.0
      %689 = vmatprep.subr.mxu0 0.0
      %690 = vmatpush1.msra.mxu0 0.0
      %691 = vmatprep.subr.mxu0 0.0
      %692 = vmatpush1.msra.mxu0 0.0
      %693 = vmatprep.subr.mxu0 0.0
      %694 = vmatpush1.msra.mxu0 0.0
      %695 = vmatprep.subr.mxu0 0.0
      %696 = vmatpush1.msra.mxu0 0.0
      %697 = vmatprep.subr.mxu0 0.0
      %698 = vmatpush1.msra.mxu0 0.0
      %699 = vmatprep.subr.mxu0 %v307
      %700 = vmatpush1.msra.mxu0 %v306
      %701 = vmatprep.subr.mxu0 0.0
      %702 = vmatpush2.msra.mxu0 0.0
      %703 = vmatprep.subr.mxu0 0.0
      %704 = vmatpush2.msra.mxu0 0.0
      %705 = vmatprep.subr.mxu0 0.0
      %706 = vmatpush2.msra.mxu0 0.0
      %707 = vmatprep.subr.mxu0 0.0
      %708 = vmatpush2.msra.mxu0 0.0
      %709 = vmatprep.subr.mxu0 0.0
      %710 = vmatpush2.msra.mxu0 0.0
      %711 = vmatprep.subr.mxu0 0.0
      %712 = vmatpush2.msra.mxu0 0.0
      %713 = vmatprep.subr.mxu0 0.0
      %714 = vmatpush2.msra.mxu0 0.0
      %715 = vmatprep.subr.mxu0 0.0
      %716 = vmatpush2.msra.mxu0 0.0
      %717 = vmatprep.subr.mxu0 0.0
      %718 = vmatpush2.msra.mxu0 0.0
      %719 = vmatprep.subr.mxu0 0.0
      %720 = vmatpush2.msra.mxu0 0.0
      %721 = vmatprep.subr.mxu0 0.0
      %722 = vmatpush2.msra.mxu0 0.0
      %723 = vmatprep.subr.mxu0 0.0
      %724 = vmatpush2.msra.mxu0 0.0
      %725 = vmatprep.subr.mxu0 0.0
      %726 = vmatpush2.msra.mxu0 0.0
      %727 = vmatprep.subr.mxu0 0.0
      %728 = vmatpush2.msra.mxu0 0.0
      %729 = vmatprep.subr.mxu0 0.0
      %730 = vmatpush2.msra.mxu0 0.0
      %731 = vmatprep.subr.mxu0 0.0
      %732 = vmatpush2.msra.mxu0 0.0
      %733 = vmatprep.mubr.f32.mxu0 0.0
      %734 = vmatmul.mubr.f32.gmra.mxu0 %v667
      %v735 = vpop.f32.mrf.mxu0
      %v736 = vadd.f32 0.0, %v735
      %v737 = vpop.f32.mrf.mxu0
      %v738 = vadd.f32 0.0, %v737
      %739 = vdwg.mxu0
      %v740 = vadd.f32 %v660, %v736
      %v741 = vadd.f32 %v662, %v738
      %v742 = vld [vmem:[%s7] sm:$0xff]
      %744 = vset.pattern.permute.xlu0 0
      %745 = vperm.xlu0 %744, %v742
      %v746 = vpop.permute.xlu0 %745
      %v748 = vadd.f32 %v740, %v746
      %v749 = vadd.f32 %v741, %v746
      %752 = vrot.lane.b32.xlu0 %v748, 127
      %v753 = vpop.permute.xlu0 %752
      %754 = vrot.lane.b32.xlu0 %v749, 127
      %v755 = vpop.permute.xlu0 %754
      %v756 = vsel %vm384, %v753, %v755
      %v759 = vsel %vm384, %v755, 0.0
      %v760 = vadd.f32 %v748, %v756
      %v761 = vadd.f32 %v749, %v759
      %764 = vrot.lane.b32.xlu0 %v760, 112
      %v765 = vpop.permute.xlu0 %764
      %766 = vrot.lane.b32.xlu0 %v761, 112
      %v767 = vpop.permute.xlu0 %766
      %v768 = vsel %vm406, %v765, %v767
      %v771 = vsel %vm406, %v767, 0.0
      %v772 = vadd.f32 %v760, %v768
      %v773 = vadd.f32 %v761, %v771
      %v774 = vmul.f32 %v772, 0.25
      %v775 = vmul.f32 %v773, 0.25
      %776 = vst [vmem:[%s305] sm:$0xff] %v774
      %777 = vst [vmem:[%s305 + $0x8] sm:$0xff] %v775
      %p778 = scmp.lt.s32.totalorder %s19, 1
      %s779 = scalar_select %p778, %s19, 1
      %s780 = smul.addr %s779, 2
      %s781 = smul.addr %s780, 8
      %s782 = scalar_lea.vmem %s8, %s781
      // Predicated region
      $region53: #{dis_block.1} parent=51 // pred_check
        %p783 = pneg %p210
      $region54: #{dis_block.1} parent=51 // pred_check_branch
        %785 = sbr.rel (%p783) target = $region56
      $region55: #{dis_block.1} parent=51 // pred_region
        _
      $region56: #{dis_block.1} parent=51 // pred_fallthru
        _
    $region52: #{dis_block.1} parent=5 // pred_fallthru
      _
    %p786 = scmp.le.s32.totalorder 2, %s14
    // Predicated region
    $region57: #{dis_block.1} parent=5 // pred_check
      %p787 = pneg %p786
    $region58: #{dis_block.1} parent=5 // pred_check_branch
      %789 = sbr.rel (%p787) target = $region60
    $region59: #{dis_block.1} parent=5 // pred_region
      %s790 = ssub.s32 %s14, 2
      // Predicated region
      $region61: #{dis_block.1} parent=59 // pred_check
        %p791 = pneg %p216
      $region62: #{dis_block.1} parent=59 // pred_check_branch
        %793 = sbr.rel (%p791) target = $region64
      $region63: #{dis_block.1} parent=59 // pred_region
        %p794 = scmp.lt.s32.totalorder %s20, 1
        %s795 = scalar_select %p794, %s20, 1
        %s796 = smul.addr %s795, 2
        %s797 = smul.addr %s796, 8
        %s798 = scalar_lea.vmem %s8, %s797
      $region64: #{dis_block.1} parent=59 // pred_fallthru
        _
    $region60: #{dis_block.1} parent=5 // pred_fallthru
      _
  $region6: #{dis_block.1} parent=0 // loop_footer
    %s18 = sadd.s32 1, %s14
  $region7: #{dis_block.1} parent=0 // loop_footer_branch
    %13 = sbr.rel target = $region3
  $region8: #{dis_block.1} parent=0 // loop_exit
    _

</llo_original>
